<compile_context>
chip_gen: v6e
topology: v6e:2x2x1
jax: 0.10.0
libtpu: 0.0.40
codegen_flags: <defaults>
</compile_context>

<pallas_src>
import functools
import math

import jax
import jax.numpy as jnp
from jax import lax
from jax.experimental import pallas as pl
from jax.experimental.pallas import tpu as pltpu

_LANES = 128


def _slide_weighted_bce(x, y, auto_iou):
    """Elementwise BCE-with-logits * slide modulating weight, computed in f32."""
    x = x.astype(jnp.float32)   # logits
    y = y.astype(jnp.float32)   # IoU-like targets in [0, 1]

    # Numerically stable BCEWithLogitsLoss (reduction='none'):
    #   loss = max(x, 0) - x*y + log(1 + exp(-|x|))
    bce = jnp.maximum(x, 0.0) - x * y + jnp.log1p(jnp.exp(-jnp.abs(x)))

    a = max(float(auto_iou), 0.2)
    med_w = jnp.float32(math.exp(1.0 - a))          # hoisted constant
    # high:   y >= a          -> exp(1 - y)
    # medium: a-0.1 < y < a   -> exp(1 - a)
    # low:    y <= a - 0.1    -> 1.0
    # TODO(synk): on compute-bound configs (v7x f32 / v6e bf16) replace
    # jnp.exp(1 - y) with a VPU polynomial if a bundle dump shows EUP saturated.
    mw = jnp.where(y >= a, jnp.exp(1.0 - y),
                   jnp.where(y > a - 0.1, med_w, jnp.float32(1.0)))
    return bce * mw


def _tail_mask(shape, row0, total, lanes):
    """Bool mask: True where the flat (row-major) element index is < total."""
    full_rows = total // lanes      # static python ints
    rem = total % lanes
    r = lax.broadcasted_iota(jnp.int32, shape, 0) + row0
    mask = r < full_rows
    if rem:
        c = lax.broadcasted_iota(jnp.int32, shape, 1)
        mask = mask | ((r == full_rows) & (c < rem))
    return mask


def _slide_loss_single_kernel(pred_ref, true_ref, out_ref, *,
                              auto_iou, total, inv_total, need_mask):
    """Whole problem in one block: compute, mask tail, reduce once."""
    loss = _slide_weighted_bce(pred_ref[...], true_ref[...], auto_iou)
    if need_mask:
        loss = jnp.where(_tail_mask(loss.shape, 0, total, loss.shape[1]),
                         loss, 0.0)
    out_ref[...] = jnp.sum(loss, keepdims=True) * jnp.float32(inv_total)


def _slide_loss_multi_kernel(pred_ref, true_ref, out_ref, *,
                             auto_iou, total, row_tile, inner_steps, need_mask):
    """2-D grid: ('parallel' chunks, 'arbitrary' within-chunk accumulation).

    The (8, lanes) output block is VMEM-resident across the inner axis and acts
    as the accumulator; the wrapper sums the per-chunk partials.
    """
    i = pl.program_id(1)
    loss = _slide_weighted_bce(pred_ref[...], true_ref[...], auto_iou)
    if need_mask:
        blk = pl.program_id(0) * inner_steps + i        # logical (unclamped) block
        loss = jnp.where(
            _tail_mask(loss.shape, blk * row_tile, total, loss.shape[1]),
            loss, 0.0)

    # Fold the (row_tile, lanes) tile into one (8, lanes) vreg tile with pure
    # VPU adds; the single cross-lane reduce happens in the wrapper.
    # TODO(synk): on compute-bound configs the idle MXU could do this fold
    # (jnp.dot(ones, loss)) to free ~1 VALU add/element.
    partial = loss.reshape(row_tile // 8, 8, loss.shape[1]).sum(axis=0)

    @pl.when(i == 0)
    def _():
        out_ref[...] = partial

    @pl.when(i > 0)
    def _():
        out_ref[...] += partial


def slide_loss(pred, true, auto_iou=0.5, *, row_tile=4096,
               max_single_rows=4096, n_chunks=2):
    """SlideLoss(nn.BCEWithLogitsLoss()) forward (reduction='mean'). Scalar."""
    assert pred.shape == true.shape, (pred.shape, true.shape)
    total = int(pred.size)
    assert total > 0, "SlideLoss of an empty tensor"
    lanes = _LANES

    rows = -(-total // lanes)
    padded = rows * lanes

    pred_flat = pred.reshape(-1)
    true_flat = true.reshape(-1)
    if padded != total:
        # <=127-element pad just for lane alignment; masked inside the kernel
        # (zero-padding is NOT loss-neutral: BCE(0,0) = ln 2).
        pred_flat = jnp.pad(pred_flat, (0, padded - total))
        true_flat = jnp.pad(true_flat, (0, padded - total))
    pred2d = pred_flat.reshape(rows, lanes)
    true2d = true_flat.reshape(rows, lanes)

    inv_total = 1.0 / float(total)
    bytes_io = (pred2d.size * pred2d.dtype.itemsize
                + true2d.size * true2d.dtype.itemsize)

    if rows <= max_single_rows:
        # Single grid step: no accumulator carry, no pipeline overhead.
        need_mask = (padded != total)
        kernel = functools.partial(
            _slide_loss_single_kernel, auto_iou=float(auto_iou),
            total=total, inv_total=inv_total, need_mask=need_mask)
        out = pl.pallas_call(
            kernel,
            out_shape=jax.ShapeDtypeStruct((1, 1), jnp.float32),
            grid=(1,),
            in_specs=[pl.BlockSpec((rows, lanes), lambda i: (0, 0)),
                      pl.BlockSpec((rows, lanes), lambda i: (0, 0))],
            out_specs=pl.BlockSpec((1, 1), lambda i: (0, 0)),
            compiler_params=pltpu.CompilerParams(
                dimension_semantics=("arbitrary",),
                vmem_limit_bytes=32 * 1024 * 1024),
            cost_estimate=pl.CostEstimate(
                flops=17 * total, transcendentals=3 * total,
                bytes_accessed=bytes_io + 4),
        )(pred2d, true2d)
        return out[0, 0]

    # Large inputs: fixed 4096-row tiles (2 MiB/block f32, 2 inputs x 2 buffers
    # = 8 MiB, well under the 32 MiB scoped VMEM limit on every generation).
    n_blocks = -(-rows // row_tile)
    chunks = max(1, min(n_chunks, n_blocks))
    inner = -(-n_blocks // chunks)
    covered = chunks * inner * row_tile * lanes
    need_mask = (covered != total)
    last_block = n_blocks - 1

    def in_map(o, i):
        # Clamp so redundant / boundary grid steps never start a DMA past the
        # array; their contribution is zeroed by the in-kernel mask.
        return (jnp.minimum(o * inner + i, last_block), 0)

    kernel = functools.partial(
        _slide_loss_multi_kernel, auto_iou=float(auto_iou), total=total,
        row_tile=row_tile, inner_steps=inner, need_mask=need_mask)
    partials = pl.pallas_call(
        kernel,
        out_shape=jax.ShapeDtypeStruct((chunks * 8, lanes), jnp.float32),
        grid=(chunks, inner),
        in_specs=[pl.BlockSpec((row_tile, lanes), in_map),
                  pl.BlockSpec((row_tile, lanes), in_map)],
        out_specs=pl.BlockSpec((8, lanes), lambda o, i: (o, 0)),
        compiler_params=pltpu.CompilerParams(
            dimension_semantics=("parallel", "arbitrary"),
            vmem_limit_bytes=32 * 1024 * 1024),
        cost_estimate=pl.CostEstimate(
            flops=17 * total, transcendentals=3 * total,
            bytes_accessed=bytes_io + chunks * 8 * lanes * 4),
    )(pred2d, true2d)
    return jnp.sum(partials) * jnp.float32(inv_total)


def _slide_loss_ref(pred, true, auto_iou=0.5):
    """Pure-JAX reference matching the PyTorch module (reduction='mean')."""
    x = pred.astype(jnp.float32)
    y = true.astype(jnp.float32)
    bce = jnp.maximum(x, 0.0) - x * y + jnp.log1p(jnp.exp(-jnp.abs(x)))
    a = max(auto_iou, 0.2)
    low = (y <= a - 0.1).astype(jnp.float32)
    med = ((y > a - 0.1) & (y < a)).astype(jnp.float32)
    high = (y >= a).astype(jnp.float32)
    mw = 1.0 * low + math.exp(1.0 - a) * med + jnp.exp(-(y - 1.0)) * high
    return jnp.mean(bce * mw)


if __name__ == "__main__":
    key = jax.random.PRNGKey(0)
    k1, k2, k3, k4, k5, k6 = jax.random.split(key, 6)

    # Small case from the spec (NCHW = 2,4,16,16): single-block path.
    pred = jax.random.normal(k1, (2, 4, 16, 16), dtype=jnp.float32)
    true = jax.random.uniform(k2, (2, 4, 16, 16), dtype=jnp.float32)
    out = jax.block_until_ready(slide_loss(pred, true, auto_iou=0.5))
    ref = _slide_loss_ref(pred, true, auto_iou=0.5)
    assert jnp.allclose(out, ref, rtol=1e-5, atol=1e-6), (out, ref)

    # Ragged size (not a multiple of 128): exercises in-kernel tail masking.
    pred = jax.random.normal(k3, (3, 7, 19), dtype=jnp.float32)
    true = jax.random.uniform(k4, (3, 7, 19), dtype=jnp.float32)
    out = jax.block_until_ready(slide_loss(pred, true, auto_iou=0.5))
    ref = _slide_loss_ref(pred, true, auto_iou=0.5)
    assert jnp.allclose(out, ref, rtol=1e-5, atol=1e-6), (out, ref)

    # Larger case: exercises the 2-D ('parallel','arbitrary') multi-block path.
    pred = jax.random.normal(k5, (8, 3, 160, 160), dtype=jnp.float32)
    true = jax.random.uniform(k6, (8, 3, 160, 160), dtype=jnp.float32)
    out = jax.block_until_ready(slide_loss(pred, true, auto_iou=0.5))
    ref = _slide_loss_ref(pred, true, auto_iou=0.5)
    assert jnp.allclose(out, ref, rtol=1e-4, atol=1e-6), (out, ref)

    print("KERNEL_OK")
</pallas_src>

<mosaic_0001>
module attributes {stable_mosaic.version = 11 : i64} {
  func.func @_slide_loss_single_kernel(%arg0: i32, %arg1: memref<16x128xf32, #tpu.memory_space<vmem>>, %arg2: memref<16x128xf32, #tpu.memory_space<vmem>>, %arg3: memref<1x1xf32, #tpu.memory_space<vmem>>) attributes {dimension_semantics = [#tpu.dimension_semantics<arbitrary>], iteration_bounds = array<i64: 1>, scalar_prefetch = 0 : i64, scratch_operands = 0 : i64, tpu.core_type = #tpu.core_type<tc>, window_params = [{pipeline_mode = #tpu.pipeline_mode<synchronous>, transform_indices = @transform_0, window_bounds = array<i64: 16, 128>}, {pipeline_mode = #tpu.pipeline_mode<synchronous>, transform_indices = @transform_1, window_bounds = array<i64: 16, 128>}, {pipeline_mode = #tpu.pipeline_mode<synchronous>, transform_indices = @transform_2, window_bounds = array<i64: 1, 1>}]} {
    %c0 = arith.constant 0 : index
    %c0_0 = arith.constant 0 : index
    %0 = vector.load %arg1[%c0, %c0_0] : memref<16x128xf32, #tpu.memory_space<vmem>>, vector<16x128xf32>
    %c0_1 = arith.constant 0 : index
    %c0_2 = arith.constant 0 : index
    %1 = vector.load %arg2[%c0_1, %c0_2] : memref<16x128xf32, #tpu.memory_space<vmem>>, vector<16x128xf32>
    %cst = arith.constant 0.000000e+00 : f32
    %2 = vector.broadcast %cst : f32 to vector<16x128xf32>
    %3 = arith.maximumf %0, %2 : vector<16x128xf32>
    %4 = arith.mulf %0, %1 : vector<16x128xf32>
    %5 = arith.subf %3, %4 : vector<16x128xf32>
    %6 = math.absf %0 : vector<16x128xf32>
    %cst_3 = arith.constant 0.000000e+00 : f32
    %7 = vector.broadcast %cst_3 : f32 to vector<16x128xf32>
    %8 = arith.subf %7, %6 : vector<16x128xf32>
    %9 = math.exp %8 : vector<16x128xf32>
    %10 = math.log1p %9 : vector<16x128xf32>
    %11 = arith.addf %5, %10 : vector<16x128xf32>
    %cst_4 = arith.constant 5.000000e-01 : f32
    %12 = vector.broadcast %cst_4 : f32 to vector<16x128xf32>
    %13 = arith.cmpf oge, %1, %12 : vector<16x128xf32>
    %cst_5 = arith.constant 1.000000e+00 : f32
    %14 = vector.broadcast %cst_5 : f32 to vector<16x128xf32>
    %15 = arith.subf %14, %1 : vector<16x128xf32>
    %16 = math.exp %15 : vector<16x128xf32>
    %cst_6 = arith.constant 4.000000e-01 : f32
    %17 = vector.broadcast %cst_6 : f32 to vector<16x128xf32>
    %18 = arith.cmpf ogt, %1, %17 : vector<16x128xf32>
    %cst_7 = arith.constant 1.64872122 : f32
    %cst_8 = arith.constant 1.000000e+00 : f32
    %19 = vector.broadcast %cst_7 : f32 to vector<16x128xf32>
    %20 = vector.broadcast %cst_8 : f32 to vector<16x128xf32>
    %21 = arith.select %18, %19, %20 : vector<16x128xi1>, vector<16x128xf32>
    %22 = arith.select %13, %16, %21 : vector<16x128xi1>, vector<16x128xf32>
    %23 = arith.mulf %11, %22 : vector<16x128xf32>
    %24 = vector.shape_cast %23 : vector<16x128xf32> to vector<1x16x128xf32>
    %cst_9 = arith.constant dense<0.000000e+00> : vector<1xf32>
    %25 = vector.multi_reduction <add>, %24, %cst_9 [1, 2] : vector<1x16x128xf32> to vector<1xf32>
    %26 = vector.shape_cast %25 : vector<1xf32> to vector<1x1x1xf32>
    %27 = vector.extract %26[0, 0, 0] : f32 from vector<1x1x1xf32>
    %28 = vector.broadcast %27 : f32 to vector<1x1xf32>
    %cst_10 = arith.constant 4.8828125E-4 : f32
    %29 = vector.broadcast %cst_10 : f32 to vector<1x1xf32>
    %30 = arith.mulf %28, %29 : vector<1x1xf32>
    %c0_11 = arith.constant 0 : index
    %c0_12 = arith.constant 0 : index
    %31 = vector.load %arg3[%c0_11, %c0_12] : memref<1x1xf32, #tpu.memory_space<vmem>>, vector<1x1xf32>
    tpu.vector_store %arg3[%c0_11, %c0_12], %30 {strides = array<i32>} : memref<1x1xf32, #tpu.memory_space<vmem>>, vector<1x1xf32>,
    return
  }
  func.func @transform_0(%arg0: i32) -> (i32, i32) {
    %c0_i32 = arith.constant 0 : i32
    %c0_i32_0 = arith.constant 0 : i32
    %c0_i32_1 = arith.constant 0 : i32
    return %c0_i32, %c0_i32_0 : i32, i32
  }
  func.func @transform_1(%arg0: i32) -> (i32, i32) {
    %c0_i32 = arith.constant 0 : i32
    %c0_i32_0 = arith.constant 0 : i32
    %c0_i32_1 = arith.constant 0 : i32
    return %c0_i32, %c0_i32_0 : i32, i32
  }
  func.func @transform_2(%arg0: i32) -> (i32, i32) {
    %c0_i32 = arith.constant 0 : i32
    %c0_i32_0 = arith.constant 0 : i32
    %c0_i32_1 = arith.constant 0 : i32
    return %c0_i32, %c0_i32_0 : i32, i32
  }
}

</mosaic_0001>

<llo_original>
// kernel: tpu_custom_call.1
$region0: #{tpu_custom_call.1}
  #allocation0 [shape = 'u32[]', space=smem, size = 0x4, offset = 0x4, fixed_abs, tag = 'smem constant byte address 0x4 - core index']
  #allocation1 [shape = 'u32[144,128]{1,0:T(1,128)}', space=vmem, size = 0x12000, scoped, tag = 'internal scratch']
  %s0 = inlined_call_operand.hbm [shape: f32[16,128], index: 0, kind: input, shape index: {}]
  %s1 = inlined_call_operand.hbm [shape: f32[16,128], index: 1, kind: input, shape index: {}]
  %s2 = inlined_call_operand.hbm [shape: f32[1,1], index: 2, kind: output, shape index: {}]
  %s3 = sld [smem:[#allocation0]]
  $region26: #{tpu_custom_call.1} parent=0
    _
  %s5 = ssub.s32 1, %s3
  %s6 = scalar_select 0, %s5, %s3
  $region1: #{tpu_custom_call.1} parent=0
    #allocation2 [shape = 'u8[8192]{0}', space=vmem, size = 0x2000, scoped, tag = 'input window, operand 0, single buffered']
    #allocation3 [shape = 's32[1]{0}', space=sflag, size = 0x4, scoped, tag = 'scoped memory for tpu_custom_call.1']
    #allocation4 [shape = 's32[1]{0}', space=sflag, size = 0x4, scoped, tag = 'scoped memory for tpu_custom_call.1']
    #allocation5 [shape = 'u8[8192]{0}', space=vmem, size = 0x2000, scoped, tag = 'input window, operand 1, single buffered']
    #allocation6 [shape = 's32[1]{0}', space=sflag, size = 0x4, scoped, tag = 'scoped memory for tpu_custom_call.1']
    #allocation7 [shape = 'u8[512]{0}', space=vmem, size = 0x400, scoped, tag = 'output window, operand 0, single buffered']
    %7 = vsyncpa [#allocation3], 0
    %8 = vsyncpa [#allocation6], 0
    %9 = vsyncpa [#allocation4], 0
    // Predicated region
    $region2: #{tpu_custom_call.1} parent=1 // pred_check
      _
    $region3: #{tpu_custom_call.1} parent=1 // pred_check_branch
      %11 = sbr.rel (0) target = $region5
    $region4: #{tpu_custom_call.1} parent=1 // pred_region
      %s13 = ssub.s32 256, 256
      %14 = vsyncadd [#allocation3], %s13
      %s15 = sshll.u32 [#allocation2], 4
      %s16 = int_to_ptr.vmem [resolvable:$true] %s15
      %21 = dma.hbm_to_vmem [thread:$0]  %s0, 256, %s16, [#allocation3], 128, 128, 8
    $region5: #{tpu_custom_call.1} parent=1 // pred_fallthru
      _
    // Predicated region
    $region6: #{tpu_custom_call.1} parent=1 // pred_check
      _
    $region7: #{tpu_custom_call.1} parent=1 // pred_check_branch
      %23 = sbr.rel (0) target = $region9
    $region8: #{tpu_custom_call.1} parent=1 // pred_region
      %s25 = ssub.s32 256, 256
      %26 = vsyncadd [#allocation6], %s25
      %s27 = sshll.u32 [#allocation5], 4
      %s28 = int_to_ptr.vmem [resolvable:$true] %s27
      %33 = dma.hbm_to_vmem [thread:$0]  %s1, 256, %s28, [#allocation6], 128, 128, 8
    $region9: #{tpu_custom_call.1} parent=1 // pred_fallthru
      _
    // Predicated region
    $region10: #{tpu_custom_call.1} parent=1 // pred_check
      _
    $region11: #{tpu_custom_call.1} parent=1 // pred_check_branch
      %35 = sbr.rel (0) target = $region13
    $region12: #{tpu_custom_call.1} parent=1 // pred_region
      %36 = dma.done [#allocation3], 256
    $region13: #{tpu_custom_call.1} parent=1 // pred_fallthru
      _
    // Predicated region
    $region14: #{tpu_custom_call.1} parent=1 // pred_check
      _
    $region15: #{tpu_custom_call.1} parent=1 // pred_check_branch
      %38 = sbr.rel (0) target = $region17
    $region16: #{tpu_custom_call.1} parent=1 // pred_region
      %39 = dma.done [#allocation6], 256
    $region17: #{tpu_custom_call.1} parent=1 // pred_fallthru
      _
    %v40 = vld [vmem:[#allocation2] sm:$0xff]
    %v41 = vld [vmem:[#allocation2 + $0x8] sm:$0xff]
    %v42 = vld [vmem:[#allocation5] sm:$0xff]
    %v43 = vld [vmem:[#allocation5 + $0x8] sm:$0xff]
    %v44 = vmax.f32 %v40, 0.0
    %v45 = vmax.f32 %v41, 0.0
    %v46 = vmul.f32 %v40, %v42
    %v47 = vmul.f32 %v41, %v43
    %v48 = vsub.f32 %v44, %v46
    %v49 = vsub.f32 %v45, %v47
    %v50 = vand.u32 2147483647, %v40
    %v51 = vand.u32 2147483647, %v41
    %v52 = vsub.f32 0.0, %v50
    %v53 = vsub.f32 0.0, %v51
    %v54 = vmul.f32 %v52, 1.442695
    %v55 = vpow.pop %v54
    %v56 = vmul.f32 %v53, 1.442695
    %v57 = vpow.pop %v56
    %v58 = vadd.f32 %v55, 1.0
    %v59 = vlog2.pop %v58
    %v60 = vmul.f32 %v59, 0.6931472
    %v61 = vmul.f32 -0.5, %v55
    %v62 = vadd.f32 %v61, 1.0
    %v63 = vmul.f32 %v62, %v55
    %v64 = vand.u32 2147483647, %v55
    %vm65 = vcmp.lt.f32.partialorder %v64, 0.0004427343
    %v66 = vsel %vm65, %v63, %v60
    %v67 = vadd.f32 %v57, 1.0
    %v68 = vlog2.pop %v67
    %v69 = vmul.f32 %v68, 0.6931472
    %v70 = vmul.f32 -0.5, %v57
    %v71 = vadd.f32 %v70, 1.0
    %v72 = vmul.f32 %v71, %v57
    %v73 = vand.u32 2147483647, %v57
    %vm74 = vcmp.lt.f32.partialorder %v73, 0.0004427343
    %v75 = vsel %vm74, %v72, %v69
    %v76 = vadd.f32 %v48, %v66
    %v77 = vadd.f32 %v49, %v75
    %vm78 = vcmp.ge.f32.partialorder %v42, 0.5
    %vm79 = vcmp.ge.f32.partialorder %v43, 0.5
    %v80 = vsub.f32 1.0, %v42
    %v81 = vsub.f32 1.0, %v43
    %v82 = vmul.f32 %v80, 1.442695
    %v83 = vpow.pop %v82
    %v84 = vmul.f32 %v81, 1.442695
    %v85 = vpow.pop %v84
    %vm86 = vcmp.gt.f32.partialorder %v42, 0.4
    %vm87 = vcmp.gt.f32.partialorder %v43, 0.4
    %v88 = vsel %vm86, 1.6487212, 1.0
    %v89 = vsel %vm87, 1.6487212, 1.0
    %v90 = vsel %vm78, %v83, %v88
    %v91 = vsel %vm79, %v85, %v89
    %v92 = vmul.f32 %v76, %v90
    %v93 = vmul.f32 %v77, %v91
    %v94 = vadd.f32 %v92, %v93
    %95 = vadd.xlane.f32.xlu0 %v94
    %v96 = vpop.xlane.xlu0 %95
    %v97 = vrot.slane %v96, 4
    %v98 = vadd.f32 %v96, %v97
    %v99 = vrot.slane %v98, 2
    %v100 = vadd.f32 %v98, %v99
    %v101 = vrot.slane %v100, 1
    %v102 = vadd.f32 %v100, %v101
    %s103 = vtos %v102
    %v104 = vstv %s103
    %v105 = vmul.f32 %v104, 0.00048828125
    %vm106 = vcmask 0
    %107 = vst.msk [vmem:[#allocation7] sm:$0x1] %vm106, %v105
    // Predicated region
    $region18: #{tpu_custom_call.1} parent=1 // pred_check
      _
    $region19: #{tpu_custom_call.1} parent=1 // pred_check_branch
      %109 = sbr.rel (0) target = $region21
    $region20: #{tpu_custom_call.1} parent=1 // pred_region
      %s111 = ssub.s32 16, 16
      %112 = vsyncadd [#allocation4], %s111
      %s114 = sshll.u32 [#allocation7], 4
      %s115 = int_to_ptr.vmem [resolvable:$true] %s114
      %117 = dma.vmem_to_hbm [thread:$0]  %s115, 16, %s2, [#allocation4]
    $region21: #{tpu_custom_call.1} parent=1 // pred_fallthru
      _
    // Predicated region
    $region22: #{tpu_custom_call.1} parent=1 // pred_check
      _
    $region23: #{tpu_custom_call.1} parent=1 // pred_check_branch
      %119 = sbr.rel (0) target = $region25
    $region24: #{tpu_custom_call.1} parent=1 // pred_region
      %120 = dma.done [#allocation4], 16
    $region25: #{tpu_custom_call.1} parent=1 // pred_fallthru
      _
    %121 = vsyncpa [#allocation3], 1
    %122 = vsyncpa [#allocation6], 1
    %123 = vsyncpa [#allocation4], 1

</llo_original>
